<compile_context>
chip_gen: v7x
topology: tpu7x:2x2x1
jax: 0.10.0
libtpu: 0.0.40
codegen_flags: <defaults>
</compile_context>

<pallas_src>
import jax
import jax.numpy as jnp
from jax.experimental import pallas as pl
from jax.experimental.pallas import tpu as pltpu


def _make_kernel(TB, H, W, C, pad_l, pad_r, pad_t, pad_b,
                 has_l, has_r, has_t, has_b):
    Hp = H + pad_t + pad_b
    Wp = W + pad_l + pad_r
    WC = W * C
    WpC = Wp * C

    def kernel(x_ref, *rest):
        out_ref = rest[-1]
        mem_refs = rest[:-1]
        i = 0

        # ---- middle band: left | center | right, one lane-dense store ----
        parts = []
        if has_l:
            parts.append(jnp.broadcast_to(mem_refs[i][...], (TB, H, pad_l * C)))
            i += 1
        parts.append(x_ref[...])
        if has_r:
            parts.append(jnp.broadcast_to(mem_refs[i][...], (TB, H, pad_r * C)))
            i += 1
        band = parts[0] if len(parts) == 1 else jnp.concatenate(parts, axis=-1)
        out_ref[:, pad_t:pad_t + H, :] = band

        # ---- top / bottom bands: full Wp*C lanes, one store each ----
        if has_t:
            out_ref[:, 0:pad_t, :] = jnp.broadcast_to(
                mem_refs[i][...], (TB, pad_t, WpC))
            i += 1
        if has_b:
            out_ref[:, pad_t + H:Hp, :] = jnp.broadcast_to(
                mem_refs[i][...], (TB, pad_b, WpC))
            i += 1

    return kernel, Hp, Wp


def _choose_batch_tile(B, itemsize, H, WC, Hp, WpC,
                       vmem_cap_per_step=12 << 20):
    """Largest TB that divides B, fits the per-step VMEM cap (double-buffered
    in+out), and keeps >=2 grid steps when B >= 2 (v7x megacore)."""
    per_batch = 2 * itemsize * (H * WC + Hp * WpC)   # double-buffered in + out
    max_tb = max(1, vmem_cap_per_step // max(per_batch, 1))
    tb = int(min(B, max_tb))
    if B >= 2:
        tb = min(tb, max(1, B // 2))   # keep at least 2 parallel grid steps
    while B % tb != 0:
        tb -= 1
    return tb


def learnable_pad2d(x, mem_left, mem_right, mem_top, mem_bottom,
                    pad_left, pad_right, pad_top, pad_bottom):
    """Pallas implementation of LearnablePad2D.forward.

    x: (B, H, W, C).  mem_left/right: (1, H, pad, C); mem_top/bottom:
    (1, pad, W+pad_left+pad_right, C).  Returns
    (B, H+pad_top+pad_bottom, W+pad_left+pad_right, C).
    """
    B, H, W, C = x.shape

    # pad > 0 must come with its learnable memory (avoids silent misalignment).
    assert (pad_left == 0) or (mem_left is not None), "pad_left>0 needs mem_left"
    assert (pad_right == 0) or (mem_right is not None), "pad_right>0 needs mem_right"
    assert (pad_top == 0) or (mem_top is not None), "pad_top>0 needs mem_top"
    assert (pad_bottom == 0) or (mem_bottom is not None), "pad_bottom>0 needs mem_bottom"

    has_l = pad_left > 0 and mem_left is not None
    has_r = pad_right > 0 and mem_right is not None
    has_t = pad_top > 0 and mem_top is not None
    has_b = pad_bottom > 0 and mem_bottom is not None

    if not (has_l or has_r or has_t or has_b):
        return x  # nothing to pad

    Hp = H + pad_top + pad_bottom
    Wp = W + pad_left + pad_right
    WC, WpC = W * C, Wp * C
    itemsize = jnp.dtype(x.dtype).itemsize

    # Lane-dense views: collapse (W, C) -> W*C.
    x2 = x.reshape(B, H, WC)
    mems = []
    mem_shapes = []
    if has_l:
        mems.append(mem_left.reshape(1, H, pad_left * C))
        mem_shapes.append((1, H, pad_left * C))
    if has_r:
        mems.append(mem_right.reshape(1, H, pad_right * C))
        mem_shapes.append((1, H, pad_right * C))
    if has_t:
        mems.append(mem_top.reshape(1, pad_top, WpC))
        mem_shapes.append((1, pad_top, WpC))
    if has_b:
        mems.append(mem_bottom.reshape(1, pad_bottom, WpC))
        mem_shapes.append((1, pad_bottom, WpC))

    TB = _choose_batch_tile(B, itemsize, H, WC, Hp, WpC)
    grid = (B // TB,)

    kernel, _, _ = _make_kernel(TB, H, W, C, pad_left, pad_right,
                                pad_top, pad_bottom,
                                has_l, has_r, has_t, has_b)

    in_specs = [pl.BlockSpec((TB, H, WC), lambda b: (b, 0, 0))]
    for shp in mem_shapes:
        # Learnable pad memories are broadcast across the batch grid axis.
        in_specs.append(pl.BlockSpec(shp, lambda b: (0, 0, 0)))
    out_spec = pl.BlockSpec((TB, Hp, WpC), lambda b: (b, 0, 0))

    # VMEM budget: double-buffered in/out tiles + the (small) pad memories.
    mem_bytes = sum(s[0] * s[1] * s[2] for s in mem_shapes) * itemsize
    needed = 2 * itemsize * (TB * H * WC + TB * Hp * WpC) + 2 * mem_bytes
    vmem_limit = int(min(max(2 * needed, 4 << 20), 48 << 20))

    fn = pl.pallas_call(
        kernel,
        out_shape=jax.ShapeDtypeStruct((B, Hp, WpC), x.dtype),
        grid=grid,
        in_specs=in_specs,
        out_specs=out_spec,
        compiler_params=pltpu.CompilerParams(
            dimension_semantics=("parallel",),
            vmem_limit_bytes=vmem_limit),
    )
    out2 = fn(x2, *mems)
    return out2.reshape(B, Hp, Wp, C)

    # TODO(synk): for very large images an HBM->HBM DMA-only formulation
    # (memory_space=pl.ANY + make_async_copy per region) would skip the VMEM
    # roundtrip entirely; not needed at these sizes.


def reference_pad2d(x, mem_left, mem_right, mem_top, mem_bottom):
    """Pure-JAX reference (mirrors the torch.cat sequence)."""
    B = x.shape[0]
    out = x
    if mem_left is not None:
        out = jnp.concatenate(
            [jnp.broadcast_to(mem_left, (B,) + mem_left.shape[1:]), out], axis=2)
    if mem_right is not None:
        out = jnp.concatenate(
            [out, jnp.broadcast_to(mem_right, (B,) + mem_right.shape[1:])], axis=2)
    if mem_top is not None:
        out = jnp.concatenate(
            [jnp.broadcast_to(mem_top, (B,) + mem_top.shape[1:]), out], axis=1)
    if mem_bottom is not None:
        out = jnp.concatenate(
            [out, jnp.broadcast_to(mem_bottom, (B,) + mem_bottom.shape[1:])], axis=1)
    return out


if __name__ == "__main__":
    # Module hyper-parameters (small, consistent with the forward pass).
    B, H, W, C = 2, 16, 16, 4
    pad_left, pad_right, pad_top, pad_bottom = 2, 3, 1, 2
    new_width = W + pad_left + pad_right

    # Deterministic parameter init: randn(...) * 0.02, matching __init__.
    key = jax.random.PRNGKey(0)
    k_x, k_l, k_r, k_t, k_b = jax.random.split(key, 5)
    dtype = jnp.float32

    x = jax.random.normal(k_x, (B, H, W, C), dtype=dtype)
    mem_left = (jax.random.normal(k_l, (1, H, pad_left, C), dtype=dtype) * 0.02
                if pad_left > 0 else None)
    mem_right = (jax.random.normal(k_r, (1, H, pad_right, C), dtype=dtype) * 0.02
                 if pad_right > 0 else None)
    mem_top = (jax.random.normal(k_t, (1, pad_top, new_width, C), dtype=dtype) * 0.02
               if pad_top > 0 else None)
    mem_bottom = (jax.random.normal(k_b, (1, pad_bottom, new_width, C), dtype=dtype) * 0.02
                  if pad_bottom > 0 else None)

    out = learnable_pad2d(x, mem_left, mem_right, mem_top, mem_bottom,
                          pad_left, pad_right, pad_top, pad_bottom)
    out = jax.block_until_ready(out)

    ref = reference_pad2d(x, mem_left, mem_right, mem_top, mem_bottom)
    assert out.shape == (B, H + pad_top + pad_bottom,
                         W + pad_left + pad_right, C), out.shape
    assert jnp.allclose(out, ref, atol=0.0, rtol=0.0), "mismatch vs reference"

    print("KERNEL_OK")
</pallas_src>

<mosaic_0001>
module attributes {stable_mosaic.version = 11 : i64} {
  func.func @kernel(%arg0: i32, %arg1: memref<1x16x64xf32, #tpu.memory_space<vmem>>, %arg2: memref<1x16x8xf32, #tpu.memory_space<vmem>>, %arg3: memref<1x16x12xf32, #tpu.memory_space<vmem>>, %arg4: memref<1x1x84xf32, #tpu.memory_space<vmem>>, %arg5: memref<1x2x84xf32, #tpu.memory_space<vmem>>, %arg6: memref<1x19x84xf32, #tpu.memory_space<vmem>>) attributes {dimension_semantics = [#tpu.dimension_semantics<parallel>], iteration_bounds = array<i64: 2>, scalar_prefetch = 0 : i64, scratch_operands = 0 : i64, tpu.core_type = #tpu.core_type<tc>, window_params = [{transform_indices = @transform_0, window_bounds = array<i64: 1, 16, 64>}, {pipeline_mode = #tpu.pipeline_mode<synchronous>, transform_indices = @transform_1, window_bounds = array<i64: 1, 16, 8>}, {pipeline_mode = #tpu.pipeline_mode<synchronous>, transform_indices = @transform_2, window_bounds = array<i64: 1, 16, 12>}, {pipeline_mode = #tpu.pipeline_mode<synchronous>, transform_indices = @transform_3, window_bounds = array<i64: 1, 1, 84>}, {pipeline_mode = #tpu.pipeline_mode<synchronous>, transform_indices = @transform_4, window_bounds = array<i64: 1, 2, 84>}, {transform_indices = @transform_5, window_bounds = array<i64: 1, 19, 84>}]} {
    %c0 = arith.constant 0 : index
    %c0_0 = arith.constant 0 : index
    %c0_1 = arith.constant 0 : index
    %0 = vector.load %arg2[%c0, %c0_0, %c0_1] : memref<1x16x8xf32, #tpu.memory_space<vmem>>, vector<1x16x8xf32>
    %c0_2 = arith.constant 0 : index
    %c0_3 = arith.constant 0 : index
    %c0_4 = arith.constant 0 : index
    %1 = vector.load %arg1[%c0_2, %c0_3, %c0_4] : memref<1x16x64xf32, #tpu.memory_space<vmem>>, vector<1x16x64xf32>
    %c0_5 = arith.constant 0 : index
    %c0_6 = arith.constant 0 : index
    %c0_7 = arith.constant 0 : index
    %2 = vector.load %arg3[%c0_5, %c0_6, %c0_7] : memref<1x16x12xf32, #tpu.memory_space<vmem>>, vector<1x16x12xf32>
    %3 = tpu.concatenate %0, %1, %2 in 2 : vector<1x16x8xf32>, vector<1x16x64xf32>, vector<1x16x12xf32> -> vector<1x16x84xf32>
    %c0_8 = arith.constant 0 : index
    %c1 = arith.constant 1 : index
    %c0_9 = arith.constant 0 : index
    %4 = vector.load %arg6[%c0_8, %c1, %c0_9] : memref<1x19x84xf32, #tpu.memory_space<vmem>>, vector<1x16x84xf32>
    tpu.vector_store %arg6[%c0_8, %c1, %c0_9], %3 {strides = array<i32>} : memref<1x19x84xf32, #tpu.memory_space<vmem>>, vector<1x16x84xf32>,
    %c0_10 = arith.constant 0 : index
    %c0_11 = arith.constant 0 : index
    %c0_12 = arith.constant 0 : index
    %5 = vector.load %arg4[%c0_10, %c0_11, %c0_12] : memref<1x1x84xf32, #tpu.memory_space<vmem>>, vector<1x1x84xf32>
    %c0_13 = arith.constant 0 : index
    %c0_14 = arith.constant 0 : index
    %c0_15 = arith.constant 0 : index
    %6 = vector.load %arg6[%c0_13, %c0_14, %c0_15] : memref<1x19x84xf32, #tpu.memory_space<vmem>>, vector<1x1x84xf32>
    tpu.vector_store %arg6[%c0_13, %c0_14, %c0_15], %5 {strides = array<i32>} : memref<1x19x84xf32, #tpu.memory_space<vmem>>, vector<1x1x84xf32>,
    %c0_16 = arith.constant 0 : index
    %c0_17 = arith.constant 0 : index
    %c0_18 = arith.constant 0 : index
    %7 = vector.load %arg5[%c0_16, %c0_17, %c0_18] : memref<1x2x84xf32, #tpu.memory_space<vmem>>, vector<1x2x84xf32>
    %c0_19 = arith.constant 0 : index
    %c17 = arith.constant 17 : index
    %c0_20 = arith.constant 0 : index
    %8 = vector.load %arg6[%c0_19, %c17, %c0_20] : memref<1x19x84xf32, #tpu.memory_space<vmem>>, vector<1x2x84xf32>
    tpu.vector_store %arg6[%c0_19, %c17, %c0_20], %7 {strides = array<i32>} : memref<1x19x84xf32, #tpu.memory_space<vmem>>, vector<1x2x84xf32>,
    return
  }
  func.func @transform_0(%arg0: i32) -> (i32, i32, i32) {
    %c0_i32 = arith.constant 0 : i32
    %c0_i32_0 = arith.constant 0 : i32
    %c0_i32_1 = arith.constant 0 : i32
    return %arg0, %c0_i32, %c0_i32_0 : i32, i32, i32
  }
  func.func @transform_1(%arg0: i32) -> (i32, i32, i32) {
    %c0_i32 = arith.constant 0 : i32
    %c0_i32_0 = arith.constant 0 : i32
    %c0_i32_1 = arith.constant 0 : i32
    %c0_i32_2 = arith.constant 0 : i32
    return %c0_i32, %c0_i32_0, %c0_i32_1 : i32, i32, i32
  }
  func.func @transform_2(%arg0: i32) -> (i32, i32, i32) {
    %c0_i32 = arith.constant 0 : i32
    %c0_i32_0 = arith.constant 0 : i32
    %c0_i32_1 = arith.constant 0 : i32
    %c0_i32_2 = arith.constant 0 : i32
    return %c0_i32, %c0_i32_0, %c0_i32_1 : i32, i32, i32
  }
  func.func @transform_3(%arg0: i32) -> (i32, i32, i32) {
    %c0_i32 = arith.constant 0 : i32
    %c0_i32_0 = arith.constant 0 : i32
    %c0_i32_1 = arith.constant 0 : i32
    %c0_i32_2 = arith.constant 0 : i32
    return %c0_i32, %c0_i32_0, %c0_i32_1 : i32, i32, i32
  }
  func.func @transform_4(%arg0: i32) -> (i32, i32, i32) {
    %c0_i32 = arith.constant 0 : i32
    %c0_i32_0 = arith.constant 0 : i32
    %c0_i32_1 = arith.constant 0 : i32
    %c0_i32_2 = arith.constant 0 : i32
    return %c0_i32, %c0_i32_0, %c0_i32_1 : i32, i32, i32
  }
  func.func @transform_5(%arg0: i32) -> (i32, i32, i32) {
    %c0_i32 = arith.constant 0 : i32
    %c0_i32_0 = arith.constant 0 : i32
    %c0_i32_1 = arith.constant 0 : i32
    return %arg0, %c0_i32, %c0_i32_0 : i32, i32, i32
  }
}

</mosaic_0001>

<llo_original>
// kernel: tpu_custom_call.1
$region0: #{tpu_custom_call.1}
  #allocation0 [shape = 'u32[]', space=smem, size = 0x4, offset = 0x4, fixed_abs, tag = 'smem constant byte address 0x4 - core index']
  #allocation1 [shape = 'u32[144,128]{1,0:T(1,128)}', space=vmem, size = 0x12000, scoped, tag = 'internal scratch']
  %s0 = inlined_call_operand.vmem [shape: f32[2,16,64], index: 0, kind: input, shape index: {}]
  %s1 = inlined_call_operand.vmem [shape: f32[1,16,8], index: 1, kind: input, shape index: {}]
  %s2 = inlined_call_operand.vmem [shape: f32[1,16,12], index: 2, kind: input, shape index: {}]
  %s3 = inlined_call_operand.vmem [shape: f32[1,1,84], index: 3, kind: input, shape index: {}]
  %s4 = inlined_call_operand.vmem [shape: f32[1,2,84], index: 4, kind: input, shape index: {}]
  %s5 = inlined_call_operand.vmem [shape: f32[2,19,84], index: 5, kind: output, shape index: {}]
  %s6 = sld [smem:[#allocation0]]
  $region53: #{tpu_custom_call.1} parent=0
    _
  %s8 = ssub.s32 1, %s6
  %s9 = scalar_select 0, %s8, %s6
  loop: start=0, step=1, limit=4
  $region2: #{tpu_custom_call.1} parent=0 // loop_pre_header
    _
  $region3: #{tpu_custom_call.1} parent=0 // loop_header
    %s11 = sphi 0, %s15
    %p12 = scmp.ge.s32.totalorder %s11, 4
    %s21 = sphi 0, %s23
    %s24 = sphi 0, %s21
    %s25 = sphi 0, %s24
    %s41 = sphi 0, %s25
    %s45 = sphi 0, %s45
    %s47 = sphi 0, %s45
    %s48 = sphi 0, %s47
    %s62 = sphi 0, %s48
    %s66 = sphi 0, %s66
    %s68 = sphi 0, %s66
    %s69 = sphi 0, %s68
    %s83 = sphi 0, %s69
    %s87 = sphi 0, %s87
    %s89 = sphi 0, %s87
    %s90 = sphi 0, %s89
    %s104 = sphi 0, %s90
    %s108 = sphi 0, %s108
    %s110 = sphi 0, %s108
    %s111 = sphi 0, %s110
    %s125 = sphi 0, %s111
    %s131 = sphi 0, %s133
    %s134 = sphi 0, %s131
    %s135 = sphi 0, %s134
    %s151 = sphi 0, %s135
  $region4: #{tpu_custom_call.1} parent=0 // loop_header_branch
    %14 = sbr.rel (%p12) target = $region8
  $region5: #{tpu_custom_call.1} parent=0 // loop_body
    %s16 = ssub.s32 %s11, 1
    %s17 = ssub.s32 %s11, 2
    %s18 = sadd.s32 %s11, 1
    %s19 = ssub.s32 %s11, %s18
    %p20 = scmp.eq.s32.totalorder %s19, 0
    %s22 = sadd.s32 %s21, 1
    %s23 = scalar_select %p20, %s21, %s22
    %p26 = pneg %p20
    %p27 = scmp.eq.s32.totalorder %s11, 1
    %p28 = por %p26, %p27
    %p29 = scmp.ne.s32.totalorder %s21, %s24
    %p30 = scmp.eq.s32.totalorder %s11, 0
    %p31 = por %p29, %p30
    %p32 = scmp.ne.s32.totalorder %s21, %s24
    %p33 = scmp.eq.s32.totalorder %s16, 1
    %p34 = por %p32, %p33
    %p35 = scmp.ne.s32.totalorder %s24, %s25
    %p36 = scmp.eq.s32.totalorder %s16, 0
    %p37 = por %p35, %p36
    %p38 = scmp.ne.s32.totalorder %s24, %s25
    %p39 = scmp.eq.s32.totalorder %s17, 1
    %p40 = por %p38, %p39
    %p42 = scmp.ne.s32.totalorder %s25, %s41
    %p43 = scmp.eq.s32.totalorder %s17, 0
    %p44 = por %p42, %p43
    %s46 = sadd.s32 %s45, 1
    %p49 = scmp.eq.s32.totalorder %s11, 1
    %p50 = scmp.ne.s32.totalorder %s45, %s47
    %p51 = scmp.eq.s32.totalorder %s11, 0
    %p52 = por %p50, %p51
    %p53 = scmp.ne.s32.totalorder %s45, %s47
    %p54 = scmp.eq.s32.totalorder %s16, 1
    %p55 = por %p53, %p54
    %p56 = scmp.ne.s32.totalorder %s47, %s48
    %p57 = scmp.eq.s32.totalorder %s16, 0
    %p58 = por %p56, %p57
    %p59 = scmp.ne.s32.totalorder %s47, %s48
    %p60 = scmp.eq.s32.totalorder %s17, 1
    %p61 = por %p59, %p60
    %p63 = scmp.ne.s32.totalorder %s48, %s62
    %p64 = scmp.eq.s32.totalorder %s17, 0
    %p65 = por %p63, %p64
    %s67 = sadd.s32 %s66, 1
    %p70 = scmp.eq.s32.totalorder %s11, 1
    %p71 = scmp.ne.s32.totalorder %s66, %s68
    %p72 = scmp.eq.s32.totalorder %s11, 0
    %p73 = por %p71, %p72
    %p74 = scmp.ne.s32.totalorder %s66, %s68
    %p75 = scmp.eq.s32.totalorder %s16, 1
    %p76 = por %p74, %p75
    %p77 = scmp.ne.s32.totalorder %s68, %s69
    %p78 = scmp.eq.s32.totalorder %s16, 0
    %p79 = por %p77, %p78
    %p80 = scmp.ne.s32.totalorder %s68, %s69
    %p81 = scmp.eq.s32.totalorder %s17, 1
    %p82 = por %p80, %p81
    %p84 = scmp.ne.s32.totalorder %s69, %s83
    %p85 = scmp.eq.s32.totalorder %s17, 0
    %p86 = por %p84, %p85
    %s88 = sadd.s32 %s87, 1
    %p91 = scmp.eq.s32.totalorder %s11, 1
    %p92 = scmp.ne.s32.totalorder %s87, %s89
    %p93 = scmp.eq.s32.totalorder %s11, 0
    %p94 = por %p92, %p93
    %p95 = scmp.ne.s32.totalorder %s87, %s89
    %p96 = scmp.eq.s32.totalorder %s16, 1
    %p97 = por %p95, %p96
    %p98 = scmp.ne.s32.totalorder %s89, %s90
    %p99 = scmp.eq.s32.totalorder %s16, 0
    %p100 = por %p98, %p99
    %p101 = scmp.ne.s32.totalorder %s89, %s90
    %p102 = scmp.eq.s32.totalorder %s17, 1
    %p103 = por %p101, %p102
    %p105 = scmp.ne.s32.totalorder %s90, %s104
    %p106 = scmp.eq.s32.totalorder %s17, 0
    %p107 = por %p105, %p106
    %s109 = sadd.s32 %s108, 1
    %p112 = scmp.eq.s32.totalorder %s11, 1
    %p113 = scmp.ne.s32.totalorder %s108, %s110
    %p114 = scmp.eq.s32.totalorder %s11, 0
    %p115 = por %p113, %p114
    %p116 = scmp.ne.s32.totalorder %s108, %s110
    %p117 = scmp.eq.s32.totalorder %s16, 1
    %p118 = por %p116, %p117
    %p119 = scmp.ne.s32.totalorder %s110, %s111
    %p120 = scmp.eq.s32.totalorder %s16, 0
    %p121 = por %p119, %p120
    %p122 = scmp.ne.s32.totalorder %s110, %s111
    %p123 = scmp.eq.s32.totalorder %s17, 1
    %p124 = por %p122, %p123
    %p126 = scmp.ne.s32.totalorder %s111, %s125
    %p127 = scmp.eq.s32.totalorder %s17, 0
    %p128 = por %p126, %p127
    %s129 = ssub.s32 %s11, %s18
    %p130 = scmp.eq.s32.totalorder %s129, 0
    %s132 = sadd.s32 %s131, 1
    %s133 = scalar_select %p130, %s131, %s132
    %p136 = pneg %p130
    %p137 = scmp.eq.s32.totalorder %s11, 1
    %p138 = por %p136, %p137
    %p139 = scmp.ne.s32.totalorder %s131, %s134
    %p140 = scmp.eq.s32.totalorder %s11, 0
    %p141 = por %p139, %p140
    %p142 = scmp.ne.s32.totalorder %s131, %s134
    %p143 = scmp.eq.s32.totalorder %s16, 1
    %p144 = por %p142, %p143
    %p145 = scmp.ne.s32.totalorder %s134, %s135
    %p146 = scmp.eq.s32.totalorder %s16, 0
    %p147 = por %p145, %p146
    %p148 = scmp.ne.s32.totalorder %s134, %s135
    %p149 = scmp.eq.s32.totalorder %s17, 1
    %p150 = por %p148, %p149
    %p152 = scmp.ne.s32.totalorder %s135, %s151
    %p153 = scmp.eq.s32.totalorder %s17, 0
    %p154 = por %p152, %p153
    %p155 = scmp.le.s32.totalorder 1, %s11
    %p156 = scmp.lt.s32.totalorder %s11, 3
    %p157 = pnand %p155, %p156
    %p158 = pneg %p157
    // Predicated region
    $region9: #{tpu_custom_call.1} parent=5 // pred_check
      _
    $region10: #{tpu_custom_call.1} parent=5 // pred_check_branch
      %160 = sbr.rel (%p157) target = $region12
    $region11: #{tpu_custom_call.1} parent=5 // pred_region
      %s161 = ssub.s32 %s11, 1
      // Predicated region
      $region13: #{tpu_custom_call.1} parent=11 // pred_check
        %p162 = pneg %p58
      $region14: #{tpu_custom_call.1} parent=11 // pred_check_branch
        %164 = sbr.rel (%p162) target = $region16
      $region15: #{tpu_custom_call.1} parent=11 // pred_region
        _
      $region16: #{tpu_custom_call.1} parent=11 // pred_fallthru
        _
      // Predicated region
      $region17: #{tpu_custom_call.1} parent=11 // pred_check
        %p165 = pneg %p79
      $region18: #{tpu_custom_call.1} parent=11 // pred_check_branch
        %167 = sbr.rel (%p165) target = $region20
      $region19: #{tpu_custom_call.1} parent=11 // pred_region
        _
      $region20: #{tpu_custom_call.1} parent=11 // pred_fallthru
        _
      // Predicated region
      $region21: #{tpu_custom_call.1} parent=11 // pred_check
        %p168 = pneg %p100
      $region22: #{tpu_custom_call.1} parent=11 // pred_check_branch
        %170 = sbr.rel (%p168) target = $region24
      $region23: #{tpu_custom_call.1} parent=11 // pred_region
        _
      $region24: #{tpu_custom_call.1} parent=11 // pred_fallthru
        _
      // Predicated region
      $region25: #{tpu_custom_call.1} parent=11 // pred_check
        %p171 = pneg %p121
      $region26: #{tpu_custom_call.1} parent=11 // pred_check_branch
        %173 = sbr.rel (%p171) target = $region28
      $region27: #{tpu_custom_call.1} parent=11 // pred_region
        _
      $region28: #{tpu_custom_call.1} parent=11 // pred_fallthru
        _
    $region12: #{tpu_custom_call.1} parent=5 // pred_fallthru
      _
    %p174 = scmp.lt.s32.totalorder %s11, 2
    // Predicated region
    $region29: #{tpu_custom_call.1} parent=5 // pred_check
      %p175 = pneg %p174
    $region30: #{tpu_custom_call.1} parent=5 // pred_check_branch
      %177 = sbr.rel (%p175) target = $region32
    $region31: #{tpu_custom_call.1} parent=5 // pred_region
      // Predicated region
      $region33: #{tpu_custom_call.1} parent=31 // pred_check
        %p178 = pneg %p31
      $region34: #{tpu_custom_call.1} parent=31 // pred_check_branch
        %180 = sbr.rel (%p178) target = $region36
      $region35: #{tpu_custom_call.1} parent=31 // pred_region
        %p181 = scmp.lt.s32.totalorder %s11, 1
        %s182 = scalar_select %p181, %s11, 1
        %s183 = smul.addr %s182, 2
        %s184 = smul.addr %s183, 8
        %s185 = scalar_lea.vmem %s0, %s184
      $region36: #{tpu_custom_call.1} parent=31 // pred_fallthru
        _
    $region32: #{tpu_custom_call.1} parent=5 // pred_fallthru
      _
    %p186 = scmp.le.s32.totalorder 1, %s11
    %p187 = scmp.lt.s32.totalorder %s11, 3
    %p188 = pnand %p186, %p187
    %p189 = pneg %p188
    // Predicated region
    $region37: #{tpu_custom_call.1} parent=5 // pred_check
      _
    $region38: #{tpu_custom_call.1} parent=5 // pred_check_branch
      %191 = sbr.rel (%p188) target = $region40
    $region39: #{tpu_custom_call.1} parent=5 // pred_region
      %s192 = ssub.s32 %s11, 1
      %p193 = scmp.lt.s32.totalorder %s16, 1
      %s194 = scalar_select %p193, %s16, 1
      %s195 = smul.addr %s194, 2
      %s196 = smul.addr %s195, 8
      %s197 = scalar_lea.vmem %s0, %s196
      %p198 = pneg %p37
      %p199 = pneg %p34
      %p200 = pneg %p58
      %p201 = pneg %p55
      %p202 = pneg %p79
      %p203 = pneg %p76
      %p204 = pneg %p100
      %p205 = pneg %p97
      %p206 = pneg %p121
      %p207 = pneg %p118
      %p208 = pneg %p147
      %p209 = pneg %p144
      %p210 = scmp.lt.s32.totalorder %s16, 1
      %s211 = scalar_select %p210, %s16, 1
      %s212 = smul.addr %s211, 3
      %s213 = smul.addr %s212, 8
      %s214 = scalar_lea.vmem %s5, %s213
      %p215 = scmp.lt.s32.totalorder %s16, 1
      %s216 = scalar_select %p215, %s16, 1
      %s217 = smul.addr %s216, 2
      %s218 = smul.addr %s217, 8
      %s219 = scalar_lea.vmem %s0, %s218
      %p220 = scmp.lt.s32.totalorder %s16, 1
      %s221 = scalar_select %p220, %s16, 1
      %s222 = smul.addr %s221, 3
      %s223 = smul.addr %s222, 8
      %s224 = scalar_lea.vmem %s5, %s223
      %v225 = vld [vmem:[%s1] sm:$0xff]
      %v226 = vld [vmem:[%s1 + $0x8] sm:$0xff]
      %v227 = vld [vmem:[%s219] sm:$0xff]
      %v228 = vld [vmem:[%s219 + $0x8] sm:$0xff]
      %v229 = vld [vmem:[%s2] sm:$0xff]
      %v230 = vld [vmem:[%s2 + $0x8] sm:$0xff]
      %233 = vrot.lane.b32.xlu0 %v227, 8
      %v234 = vpop.permute.xlu0 %233
      %235 = vrot.lane.b32.xlu0 %v228, 8
      %v236 = vpop.permute.xlu0 %235
      %241 = vrot.lane.b32.xlu0 %v229, 72
      %v242 = vpop.permute.xlu0 %241
      %243 = vrot.lane.b32.xlu0 %v230, 72
      %v244 = vpop.permute.xlu0 %243
      %vm247 = vcmask 64512
      %v248 = vsel %vm247, %v225, %v234
      %v249 = vsel %vm247, %v226, %v236
      %vm250 = vcmask 588800
      %v251 = vsel %vm250, %v248, %v242
      %v252 = vsel %vm250, %v249, %v244
      %vm253 = vcmask 687104
      %254 = vst.msk [vmem:[%s224 + $0x1] sm:$0xff] %vm253, %v251
      %255 = vst.msk [vmem:[%s224 + $0x9] sm:$0xff] %vm253, %v252
      %v256 = vld [vmem:[%s3] sm:$0x1]
      %vm257 = vcmask 679936
      %258 = vst.msk [vmem:[%s224] sm:$0x1] %vm257, %v256
      %v259 = vld [vmem:[%s4] sm:$0x3]
      %vm260 = vcmask 680960
      %261 = vst.msk [vmem:[%s224 + $0x11] sm:$0x3] %vm260, %v259
      %p262 = scmp.lt.s32.totalorder %s16, 1
      %s263 = scalar_select %p262, %s16, 1
      %s264 = smul.addr %s263, 3
      %s265 = smul.addr %s264, 8
      %s266 = scalar_lea.vmem %s5, %s265
      // Predicated region
      $region41: #{tpu_custom_call.1} parent=39 // pred_check
        %p267 = pneg %p144
      $region42: #{tpu_custom_call.1} parent=39 // pred_check_branch
        %269 = sbr.rel (%p267) target = $region44
      $region43: #{tpu_custom_call.1} parent=39 // pred_region
        _
      $region44: #{tpu_custom_call.1} parent=39 // pred_fallthru
        _
    $region40: #{tpu_custom_call.1} parent=5 // pred_fallthru
      _
    %p270 = scmp.le.s32.totalorder 2, %s11
    // Predicated region
    $region45: #{tpu_custom_call.1} parent=5 // pred_check
      %p271 = pneg %p270
    $region46: #{tpu_custom_call.1} parent=5 // pred_check_branch
      %273 = sbr.rel (%p271) target = $region48
    $region47: #{tpu_custom_call.1} parent=5 // pred_region
      %s274 = ssub.s32 %s11, 2
      // Predicated region
      $region49: #{tpu_custom_call.1} parent=47 // pred_check
        %p275 = pneg %p150
      $region50: #{tpu_custom_call.1} parent=47 // pred_check_branch
        %277 = sbr.rel (%p275) target = $region52
      $region51: #{tpu_custom_call.1} parent=47 // pred_region
        %p278 = scmp.lt.s32.totalorder %s17, 1
        %s279 = scalar_select %p278, %s17, 1
        %s280 = smul.addr %s279, 3
        %s281 = smul.addr %s280, 8
        %s282 = scalar_lea.vmem %s5, %s281
      $region52: #{tpu_custom_call.1} parent=47 // pred_fallthru
        _
    $region48: #{tpu_custom_call.1} parent=5 // pred_fallthru
      _
  $region6: #{tpu_custom_call.1} parent=0 // loop_footer
    %s15 = sadd.s32 1, %s11
  $region7: #{tpu_custom_call.1} parent=0 // loop_footer_branch
    %10 = sbr.rel target = $region3
  $region8: #{tpu_custom_call.1} parent=0 // loop_exit
    _

</llo_original>
